<compile_context>
chip_gen: v5e
topology: v5e:2x2
jax: 0.10.0
libtpu: 0.0.40
codegen_flags: <defaults>
</compile_context>

<pallas_src>
import jax
import jax.numpy as jnp
import numpy as np
from jax import lax
from jax.experimental import pallas as pl
from jax.experimental.pallas import tpu as pltpu

_LANE = 128
_WEIGHT_TILE_BUDGET = 8 * 1024 * 1024   # max bytes for one (tile_k, cout_pad) bf16 weight tile


def _round_up(x, m):
    return (x + m - 1) // m * m


def _vmem_limit_bytes():
    """Generation-aware VMEM limit (3/4 of per-core capacity, conservative fallback)."""
    cap = 64 * 1024 * 1024            # v7x per-core physical size = safest fallback
    try:
        info = pltpu.get_tpu_info()
        cap = int(getattr(info, "vmem_capacity_bytes", cap) or cap)
    except Exception:
        pass
    return int(max(32 * 1024 * 1024, min(cap * 3 // 4, 100 * 1024 * 1024)))


def _align_tile_m(t, M):
    m_cap = _round_up(M, _LANE) if M >= _LANE else _round_up(M, 8)
    t = max(8, min(int(t), m_cap, 1024))
    if t >= 256:
        t = t // 256 * 256            # full 256x256 MXU passes on v6e/v7x
    elif t >= 128:
        t = 128
    else:
        t = max(8, t // 8 * 8)
    return t


def _pick_tile_m(M, tile_k, cout_pad, use_residual, budget):
    # Conservative per-tile VMEM accounting (double buffers; constant-index-map
    # blocks such as the weight are fetched once by the pipeliner but we still
    # budget 2 buffers for them rather than relying on that).
    fixed = 2 * tile_k * cout_pad * 2          # bf16 weight tile x2 buffers
    fixed += 6 * 8 * cout_pad * 4              # scale/shift + per-tile stat vectors
    per_row = 2 * tile_k * 2                   # bf16 cols tile x2 buffers
    per_row += 2 * cout_pad * 2                # bf16 conv-out tile x2 buffers
    per_row += 2 * cout_pad * 4                # f32 output tile x2 buffers
    per_row += cout_pad * 4                    # f32 accumulator scratch
    if use_residual:
        per_row += 2 * cout_pad * 2            # bf16 residual tile x2 buffers
    t = max(budget - fixed, per_row) // per_row
    return _align_tile_m(t, M)


# ---------------------------------------------------------------------------
# Kernels
# ---------------------------------------------------------------------------
def _bn_stats_matmul_kernel(cols_ref, w_ref, y_ref, sum_ref, sumsq_ref, acc_ref):
    """Conv matmul (K-tiled) + bf16 conv output + per-M-tile channel sum/sumsq."""
    k = pl.program_id(1)

    @pl.when(k == 0)
    def _():
        acc_ref[...] = jnp.zeros_like(acc_ref)

    acc_ref[...] += jnp.dot(cols_ref[...], w_ref[...],
                            preferred_element_type=jnp.float32)

    @pl.when(k == pl.num_programs(1) - 1)
    def _():
        acc = acc_ref[...]
        y_ref[...] = acc.astype(y_ref.dtype)
        s = jnp.sum(acc, axis=0, keepdims=True)
        ss = jnp.sum(acc * acc, axis=0, keepdims=True)
        sum_ref[...] = jnp.broadcast_to(s, sum_ref.shape)
        sumsq_ref[...] = jnp.broadcast_to(ss, sumsq_ref.shape)


def _affine_relu_kernel(y_ref, scale_ref, shift_ref, out_ref):
    """Elementwise BN scale/shift + ReLU over the stored conv output."""
    y = y_ref[...].astype(jnp.float32) * scale_ref[...] + shift_ref[...]
    out_ref[...] = jnp.maximum(y, 0.0).astype(out_ref.dtype)


def _affine_relu_res_kernel(y_ref, scale_ref, shift_ref, res_ref, out_ref):
    """Elementwise BN scale/shift + ReLU + residual add."""
    y = y_ref[...].astype(jnp.float32) * scale_ref[...] + shift_ref[...]
    y = jnp.maximum(y, 0.0) + res_ref[...].astype(jnp.float32)
    out_ref[...] = y.astype(out_ref.dtype)


def _matmul_affine_relu_kernel(cols_ref, w_ref, scale_ref, shift_ref, out_ref, acc_ref):
    """No-BN path: single fused conv matmul + bias + ReLU."""
    k = pl.program_id(1)

    @pl.when(k == 0)
    def _():
        acc_ref[...] = jnp.zeros_like(acc_ref)

    acc_ref[...] += jnp.dot(cols_ref[...], w_ref[...],
                            preferred_element_type=jnp.float32)

    @pl.when(k == pl.num_programs(1) - 1)
    def _():
        y = acc_ref[...] * scale_ref[...] + shift_ref[...]
        out_ref[...] = jnp.maximum(y, 0.0).astype(out_ref.dtype)


def _matmul_affine_relu_res_kernel(cols_ref, w_ref, scale_ref, shift_ref, res_ref,
                                   out_ref, acc_ref):
    """No-BN path with fused residual add."""
    k = pl.program_id(1)

    @pl.when(k == 0)
    def _():
        acc_ref[...] = jnp.zeros_like(acc_ref)

    acc_ref[...] += jnp.dot(cols_ref[...], w_ref[...],
                            preferred_element_type=jnp.float32)

    @pl.when(k == pl.num_programs(1) - 1)
    def _():
        y = acc_ref[...] * scale_ref[...] + shift_ref[...]
        y = jnp.maximum(y, 0.0) + res_ref[...].astype(jnp.float32)
        out_ref[...] = y.astype(out_ref.dtype)


# ---------------------------------------------------------------------------
# Wrapper
# ---------------------------------------------------------------------------
def conv_block_forward(x_nchw, weight, bias, gamma, beta, *, stride, padding,
                       use_batch_norm, use_residual, eps=1e-5,
                       tile_m=None, tile_k=None):
    N, Cin, H, W = x_nchw.shape
    Cout, _, KH, KW = weight.shape
    Ho = (H + 2 * padding - KH) // stride + 1
    Wo = (W + 2 * padding - KW) // stride + 1
    M = N * Ho * Wo
    K = KH * KW * Cin

    # Lane-dense Cout only when the write amplification is modest (<=2x);
    # tiny Cout keeps full-dim (masked) stores instead of padded writeback.
    cout_pad = _round_up(Cout, _LANE)
    if cout_pad > 2 * Cout:
        cout_pad = Cout

    # ---- glue: NCHW -> NHWC (bf16), pad, im2col ---------------------------
    # bf16 cast is fused before patch extraction so cols is materialized once.
    # TODO(synk): replace wrapper im2col (KH*KW x HBM read amplification) with
    # in-kernel shifted-window matmuls over a halo-DMA'd NHWC input, and keep
    # surrounding layers in NHWC so the boundary transposes disappear.
    x_nhwc = jnp.transpose(x_nchw, (0, 2, 3, 1)).astype(jnp.bfloat16)
    xp = jnp.pad(x_nhwc, ((0, 0), (padding, padding), (padding, padding), (0, 0)))
    patches = []
    for kh in range(KH):
        for kw in range(KW):
            patches.append(
                xp[:, kh:kh + (Ho - 1) * stride + 1:stride,
                      kw:kw + (Wo - 1) * stride + 1:stride, :])
    cols = jnp.concatenate(patches, axis=-1).reshape(M, K)

    # weight OIHW -> (kh, kw, cin, cout) -> (K, Cout), matching patch ordering.
    wmat = jnp.transpose(weight, (2, 3, 1, 0)).reshape(K, Cout).astype(jnp.float32)

    # ---- K padding / tiling (128-aligned lane dim, bounded weight tile) ----
    if tile_k is None:
        tile_k = _round_up(K, _LANE)
        if tile_k * cout_pad * 2 > _WEIGHT_TILE_BUDGET:
            tile_k = max(_LANE,
                         (_WEIGHT_TILE_BUDGET // (cout_pad * 2)) // _LANE * _LANE)
    tile_k = max(_LANE, int(tile_k) // _LANE * _LANE)
    k_pad = _round_up(K, tile_k)
    num_k = k_pad // tile_k
    if k_pad != K:
        cols = jnp.pad(cols, ((0, 0), (0, k_pad - K)))
        wmat = jnp.pad(wmat, ((0, k_pad - K), (0, 0)))
    if cout_pad != Cout:
        wmat = jnp.pad(wmat, ((0, 0), (0, cout_pad - Cout)))
    wmat = wmat.astype(jnp.bfloat16)

    # ---- M tiling (generation-aware VMEM budget) ---------------------------
    vmem_limit = _vmem_limit_bytes()
    if tile_m is None:
        tile_m = _pick_tile_m(M, tile_k, cout_pad, use_residual,
                              budget=vmem_limit - 8 * 1024 * 1024)
    tile_m = _align_tile_m(int(tile_m), M)
    m_pad = _round_up(M, tile_m)
    num_m = m_pad // tile_m
    if m_pad != M:
        cols = jnp.pad(cols, ((0, m_pad - M), (0, 0)))

    cols_spec = pl.BlockSpec((tile_m, tile_k), lambda i, k: (i, k))
    w_spec = pl.BlockSpec((tile_k, cout_pad), lambda i, k: (k, 0))
    row_spec2 = pl.BlockSpec((tile_m, cout_pad), lambda i, k: (i, 0))
    vec_spec2 = pl.BlockSpec((1, cout_pad), lambda i, k: (0, 0))
    stat_spec = pl.BlockSpec((8, cout_pad), lambda i, k: (i, 0))
    row_spec1 = pl.BlockSpec((tile_m, cout_pad), lambda i: (i, 0))
    vec_spec1 = pl.BlockSpec((1, cout_pad), lambda i: (0, 0))

    params_mk = pltpu.CompilerParams(
        dimension_semantics=("parallel", "arbitrary"), vmem_limit_bytes=vmem_limit)
    params_m = pltpu.CompilerParams(
        dimension_semantics=("parallel",), vmem_limit_bytes=vmem_limit)
    acc_scratch = pltpu.VMEM((tile_m, cout_pad), jnp.float32)

    # ---- residual stream (bf16, padded only when actually needed) ----------
    res2d = None
    if use_residual:
        assert Cin == Cout and Ho == H and Wo == W, "residual requires matching shapes"
        res2d = x_nhwc.reshape(M, Cin)            # already bf16
        if m_pad != M or cout_pad != Cout:
            res2d = jnp.pad(res2d, ((0, m_pad - M), (0, cout_pad - Cout)))

    if use_batch_norm:
        # Pass 1: conv matmul + bf16 conv output + per-M-tile channel partials.
        # Conv bias is dropped: BN mean subtraction cancels it exactly, and the
        # zero-padded M rows / K columns then contribute exactly 0 to sum/sumsq,
        # so dividing by the *true* M keeps BatchNorm statistics global & exact.
        y2d, tsum, tsumsq = pl.pallas_call(
            _bn_stats_matmul_kernel,
            out_shape=(jax.ShapeDtypeStruct((m_pad, cout_pad), jnp.bfloat16),
                       jax.ShapeDtypeStruct((num_m * 8, cout_pad), jnp.float32),
                       jax.ShapeDtypeStruct((num_m * 8, cout_pad), jnp.float32)),
            grid=(num_m, num_k),
            in_specs=[cols_spec, w_spec],
            out_specs=(row_spec2, stat_spec, stat_spec),
            scratch_shapes=[acc_scratch],
            compiler_params=params_mk,
        )(cols, wmat)

        # Per-tile partials -> global statistics (f32 merge over num_m values).
        # TODO(synk): Welford/Chan-style merge for very large M to avoid
        # E[x^2]-E[x]^2 cancellation; per-tile partials already bound it.
        sums = tsum.reshape(num_m, 8, cout_pad)[:, 0, :].sum(axis=0)
        sumsqs = tsumsq.reshape(num_m, 8, cout_pad)[:, 0, :].sum(axis=0)
        mean = sums / M
        var = jnp.maximum(sumsqs / M - mean * mean, 0.0)
        inv = lax.rsqrt(var + eps)
        gamma_p = jnp.pad(gamma.astype(jnp.float32), (0, cout_pad - Cout))
        beta_p = jnp.pad(beta.astype(jnp.float32), (0, cout_pad - Cout))
        scale_v = gamma_p * inv
        shift_v = beta_p - mean * scale_v
        scale = scale_v.reshape(1, cout_pad)
        shift = shift_v.reshape(1, cout_pad)

        # Pass 2: elementwise-only scale/shift + ReLU (+ residual), fully parallel.
        if use_residual:
            kernel, args = _affine_relu_res_kernel, (y2d, scale, shift, res2d)
            in_specs = [row_spec1, vec_spec1, vec_spec1, row_spec1]
        else:
            kernel, args = _affine_relu_kernel, (y2d, scale, shift)
            in_specs = [row_spec1, vec_spec1, vec_spec1]
        out2d = pl.pallas_call(
            kernel,
            out_shape=jax.ShapeDtypeStruct((m_pad, cout_pad), x_nchw.dtype),
            grid=(num_m,),
            in_specs=in_specs,
            out_specs=row_spec1,
            compiler_params=params_m,
        )(*args)
    else:
        # No BN: single fused pass (matmul + bias + ReLU [+ residual]).
        scale = jnp.ones((1, cout_pad), jnp.float32)
        shift = jnp.pad(bias.astype(jnp.float32),
                        (0, cout_pad - Cout)).reshape(1, cout_pad)
        if use_residual:
            kernel, args = _matmul_affine_relu_res_kernel, (cols, wmat, scale, shift, res2d)
            in_specs = [cols_spec, w_spec, vec_spec2, vec_spec2, row_spec2]
        else:
            kernel, args = _matmul_affine_relu_kernel, (cols, wmat, scale, shift)
            in_specs = [cols_spec, w_spec, vec_spec2, vec_spec2]
        out2d = pl.pallas_call(
            kernel,
            out_shape=jax.ShapeDtypeStruct((m_pad, cout_pad), x_nchw.dtype),
            grid=(num_m, num_k),
            in_specs=in_specs,
            out_specs=row_spec2,
            scratch_shapes=[acc_scratch],
            compiler_params=params_mk,
        )(*args)

    out_nhwc = out2d[:M, :Cout].reshape(N, Ho, Wo, Cout)
    return jnp.transpose(out_nhwc, (0, 3, 1, 2))   # back to NCHW


# ---------------------------------------------------------------------------
# Pure-JAX reference (mirrors torch: Conv2d -> BatchNorm2d(train) -> ReLU -> +x)
# ---------------------------------------------------------------------------
def conv_block_reference(x, weight, bias, gamma, beta, *, stride, padding,
                         use_batch_norm, use_residual, eps=1e-5):
    out = lax.conv_general_dilated(
        x, weight, (stride, stride), [(padding, padding), (padding, padding)],
        dimension_numbers=("NCHW", "OIHW", "NCHW"))
    out = out + bias[None, :, None, None]
    if use_batch_norm:
        mean = jnp.mean(out, axis=(0, 2, 3), keepdims=True)
        var = jnp.mean((out - mean) ** 2, axis=(0, 2, 3), keepdims=True)
        out = (out - mean) * lax.rsqrt(var + eps)
        out = out * gamma[None, :, None, None] + beta[None, :, None, None]
    out = jnp.maximum(out, 0.0)
    if use_residual:
        out = out + x
    return out


if __name__ == "__main__":
    def run_case(key, *, N, Cin, H, W, Cout, KH, KW, stride, padding,
                 use_batch_norm, use_residual, atol, **kw):
        k1, k2, k3, k4, k5 = jax.random.split(key, 5)
        x = jax.random.normal(k1, (N, Cin, H, W), jnp.float32)
        weight = 0.1 * jax.random.normal(k2, (Cout, Cin, KH, KW), jnp.float32)
        bias = 0.1 * jax.random.normal(k3, (Cout,), jnp.float32)
        gamma = 1.0 + 0.1 * jax.random.normal(k4, (Cout,), jnp.float32)
        beta = 0.1 * jax.random.normal(k5, (Cout,), jnp.float32)
        out = conv_block_forward(
            x, weight, bias, gamma, beta, stride=stride, padding=padding,
            use_batch_norm=use_batch_norm, use_residual=use_residual, **kw)
        out = jax.block_until_ready(out)
        ref = conv_block_reference(
            x, weight, bias, gamma, beta, stride=stride, padding=padding,
            use_batch_norm=use_batch_norm, use_residual=use_residual)
        # bf16 MXU inputs + bf16 conv-out / residual streams => ~1e-2 divergence
        # from the f32 reference (intentional trade-off).
        np.testing.assert_allclose(np.asarray(out), np.asarray(ref),
                                   rtol=2e-2, atol=atol)

    key = jax.random.PRNGKey(0)
    k_a, k_b, k_c = jax.random.split(key, 3)

    # 1) ConvBlock(4, 4, 3, 1, 1, use_batch_norm=True, use_residual=True);
    #    tile_m=128 forces a multi-tile grid so the per-tile BN partials and the
    #    elementwise apply pass are both exercised.
    run_case(k_a, N=2, Cin=4, H=16, W=16, Cout=4, KH=3, KW=3, stride=1, padding=1,
             use_batch_norm=True, use_residual=True, tile_m=128, atol=4e-2)

    # 2) plain conv + bias + ReLU, stride 2 (no BN, no residual), auto tiling.
    run_case(k_b, N=2, Cin=4, H=16, W=16, Cout=8, KH=3, KW=3, stride=2, padding=1,
             use_batch_norm=False, use_residual=False, atol=2e-2)

    # 3) BN + residual with Cin=Cout=32 and forced tile_k=128 so the K-tiled
    #    accumulator path (K=288 -> 3 tiles of 128) is exercised.
    run_case(k_c, N=2, Cin=32, H=16, W=16, Cout=32, KH=3, KW=3, stride=1, padding=1,
             use_batch_norm=True, use_residual=True, tile_m=128, tile_k=128,
             atol=5e-2)

    print("KERNEL_OK")
</pallas_src>

<mosaic_0001>
module attributes {stable_mosaic.version = 11 : i64} {
  func.func @_bn_stats_matmul_kernel(%arg0: i32, %arg1: i32, %arg2: memref<128x128xbf16, #tpu.memory_space<vmem>>, %arg3: memref<128x4xbf16, #tpu.memory_space<vmem>>, %arg4: memref<128x4xbf16, #tpu.memory_space<vmem>>, %arg5: memref<8x4xf32, #tpu.memory_space<vmem>>, %arg6: memref<8x4xf32, #tpu.memory_space<vmem>>, %arg7: memref<128x4xf32, #tpu.memory_space<vmem>>) attributes {dimension_semantics = [#tpu.dimension_semantics<parallel>, #tpu.dimension_semantics<arbitrary>], iteration_bounds = array<i64: 4, 1>, scalar_prefetch = 0 : i64, scratch_operands = 1 : i64, tpu.core_type = #tpu.core_type<tc>, window_params = [{transform_indices = @transform_0, window_bounds = array<i64: 128, 128>}, {transform_indices = @transform_1, window_bounds = array<i64: 128, 4>}, {transform_indices = @transform_2, window_bounds = array<i64: 128, 4>}, {transform_indices = @transform_3, window_bounds = array<i64: 8, 4>}, {transform_indices = @transform_4, window_bounds = array<i64: 8, 4>}]} {
    %c0_i32 = arith.constant 0 : i32
    %0 = arith.cmpi eq, %arg1, %c0_i32 : i32
    %1 = arith.extui %0 : i1 to i32
    %c0_i32_0 = arith.constant 0 : i32
    %2 = arith.cmpi ne, %1, %c0_i32_0 : i32
    scf.if %2 {
      %cst_10 = arith.constant 0.000000e+00 : f32
      %12 = vector.broadcast %cst_10 : f32 to vector<128x4xf32>
      %c0_11 = arith.constant 0 : index
      %c0_12 = arith.constant 0 : index
      %13 = vector.load %arg7[%c0_11, %c0_12] : memref<128x4xf32, #tpu.memory_space<vmem>>, vector<128x4xf32>
      tpu.vector_store %arg7[%c0_11, %c0_12], %12 {strides = array<i32>} : memref<128x4xf32, #tpu.memory_space<vmem>>, vector<128x4xf32>,
    } else {
    }
    %c0 = arith.constant 0 : index
    %c0_1 = arith.constant 0 : index
    %3 = vector.load %arg7[%c0, %c0_1] : memref<128x4xf32, #tpu.memory_space<vmem>>, vector<128x4xf32>
    %c0_2 = arith.constant 0 : index
    %c0_3 = arith.constant 0 : index
    %4 = vector.load %arg2[%c0_2, %c0_3] : memref<128x128xbf16, #tpu.memory_space<vmem>>, vector<128x128xbf16>
    %c0_4 = arith.constant 0 : index
    %c0_5 = arith.constant 0 : index
    %5 = vector.load %arg3[%c0_4, %c0_5] : memref<128x4xbf16, #tpu.memory_space<vmem>>, vector<128x4xbf16>
    %cst = arith.constant dense<0.000000e+00> : vector<128x4xf32>
    %6 = tpu.matmul %4, %5, %cst {dimension_numbers = #tpu.dot_dimension_numbers<[1], [0], [0], [1], [0, 0, 1, 1], [], []>} : vector<128x128xbf16>, vector<128x4xbf16>, vector<128x4xf32> -> vector<128x4xf32>
    %7 = arith.addf %3, %6 : vector<128x4xf32>
    %c0_6 = arith.constant 0 : index
    %c0_7 = arith.constant 0 : index
    %8 = vector.load %arg7[%c0_6, %c0_7] : memref<128x4xf32, #tpu.memory_space<vmem>>, vector<128x4xf32>
    tpu.vector_store %arg7[%c0_6, %c0_7], %7 {strides = array<i32>} : memref<128x4xf32, #tpu.memory_space<vmem>>, vector<128x4xf32>,
    %c0_i32_8 = arith.constant 0 : i32
    %9 = arith.cmpi eq, %arg1, %c0_i32_8 : i32
    %10 = arith.extui %9 : i1 to i32
    %c0_i32_9 = arith.constant 0 : i32
    %11 = arith.cmpi ne, %10, %c0_i32_9 : i32
    scf.if %11 {
      %c0_10 = arith.constant 0 : index
      %c0_11 = arith.constant 0 : index
      %12 = vector.load %arg7[%c0_10, %c0_11] : memref<128x4xf32, #tpu.memory_space<vmem>>, vector<128x4xf32>
      %13 = arith.truncf %12 : vector<128x4xf32> to vector<128x4xbf16>
      %c0_12 = arith.constant 0 : index
      %c0_13 = arith.constant 0 : index
      %14 = vector.load %arg4[%c0_12, %c0_13] : memref<128x4xbf16, #tpu.memory_space<vmem>>, vector<128x4xbf16>
      tpu.vector_store %arg4[%c0_12, %c0_13], %13 {strides = array<i32>} : memref<128x4xbf16, #tpu.memory_space<vmem>>, vector<128x4xbf16>,
      %cst_14 = arith.constant dense<0.000000e+00> : vector<4xf32>
      %15 = vector.multi_reduction <add>, %12, %cst_14 [0] : vector<128x4xf32> to vector<4xf32>
      %16 = vector.shape_cast %15 : vector<4xf32> to vector<1x4xf32>
      %17 = arith.mulf %12, %12 : vector<128x4xf32>
      %cst_15 = arith.constant dense<0.000000e+00> : vector<4xf32>
      %18 = vector.multi_reduction <add>, %17, %cst_15 [0] : vector<128x4xf32> to vector<4xf32>
      %19 = vector.shape_cast %18 : vector<4xf32> to vector<1x4xf32>
      %20 = vector.shape_cast %16 : vector<1x4xf32> to vector<1x4xf32>
      %21 = vector.broadcast %20 : vector<1x4xf32> to vector<8x4xf32>
      %c0_16 = arith.constant 0 : index
      %c0_17 = arith.constant 0 : index
      %22 = vector.load %arg5[%c0_16, %c0_17] : memref<8x4xf32, #tpu.memory_space<vmem>>, vector<8x4xf32>
      tpu.vector_store %arg5[%c0_16, %c0_17], %21 {strides = array<i32>} : memref<8x4xf32, #tpu.memory_space<vmem>>, vector<8x4xf32>,
      %23 = vector.shape_cast %19 : vector<1x4xf32> to vector<1x4xf32>
      %24 = vector.broadcast %23 : vector<1x4xf32> to vector<8x4xf32>
      %c0_18 = arith.constant 0 : index
      %c0_19 = arith.constant 0 : index
      %25 = vector.load %arg6[%c0_18, %c0_19] : memref<8x4xf32, #tpu.memory_space<vmem>>, vector<8x4xf32>
      tpu.vector_store %arg6[%c0_18, %c0_19], %24 {strides = array<i32>} : memref<8x4xf32, #tpu.memory_space<vmem>>, vector<8x4xf32>,
    } else {
    }
    return
  }
  func.func @transform_0(%arg0: i32, %arg1: i32) -> (i32, i32) {
    %c0_i32 = arith.constant 0 : i32
    return %arg0, %arg1 : i32, i32
  }
  func.func @transform_1(%arg0: i32, %arg1: i32) -> (i32, i32) {
    %c0_i32 = arith.constant 0 : i32
    %c0_i32_0 = arith.constant 0 : i32
    return %arg1, %c0_i32 : i32, i32
  }
  func.func @transform_2(%arg0: i32, %arg1: i32) -> (i32, i32) {
    %c0_i32 = arith.constant 0 : i32
    %c0_i32_0 = arith.constant 0 : i32
    return %arg0, %c0_i32 : i32, i32
  }
  func.func @transform_3(%arg0: i32, %arg1: i32) -> (i32, i32) {
    %c0_i32 = arith.constant 0 : i32
    %c0_i32_0 = arith.constant 0 : i32
    return %arg0, %c0_i32 : i32, i32
  }
  func.func @transform_4(%arg0: i32, %arg1: i32) -> (i32, i32) {
    %c0_i32 = arith.constant 0 : i32
    %c0_i32_0 = arith.constant 0 : i32
    return %arg0, %c0_i32 : i32, i32
  }
}

</mosaic_0001>

<llo_original>
// kernel: tpu_custom_call.1
$region0: #{tpu_custom_call.1}
  #allocation0 [shape = 'u32[]', space=smem, size = 0x4, offset = 0x4, fixed_abs, tag = 'smem constant byte address 0x4 - core index']
  #allocation1 [shape = 'u32[72,128]{1,0:T(1,128)}', space=vmem, size = 0x9000, scoped, tag = 'internal scratch']
  #allocation2 [shape = 'f32[128,4]{1,0:T(8,128)}', space=vmem, size = 0x10000, scoped, tag = 'scratch operand']
  %s0 = inlined_call_operand.hbm [shape: bf16[512,128], index: 0, kind: input, shape index: {}]
  %s1 = inlined_call_operand.vmem [shape: bf16[128,4], index: 1, kind: input, shape index: {}]
  %s2 = inlined_call_operand.vmem [shape: bf16[512,4], index: 2, kind: output, shape index: {0}]
  %s3 = inlined_call_operand.vmem [shape: f32[32,4], index: 3, kind: output, shape index: {1}]
  %s4 = inlined_call_operand.vmem [shape: f32[32,4], index: 4, kind: output, shape index: {2}]
  %5 = xla_tuple %s2, %s3, %s4
  %s6 = sld [smem:[#allocation0]]
  $region69: #{tpu_custom_call.1} parent=0
    _
  %s8 = ssub.s32 1, %s6
  %s9 = scalar_select 0, %s8, %s6
  $region1: #{tpu_custom_call.1} parent=0
    #allocation3 [shape = 'u8[65536]{0}', space=vmem, size = 0x10000, scoped, tag = 'input window, operand 0']
    #allocation4 [shape = 's32[2]{0}', space=sflag, size = 0x8, scoped, tag = 'scoped memory for tpu_custom_call.1']
    %10 = vsyncpa [#allocation4], 0
    %s11 = scalar_lea.sflag [#allocation4], 1
    %12 = vsyncpa %s11, 0
    loop: start=0, step=1, limit=6
    $region2: #{tpu_custom_call.1} parent=1 // loop_pre_header
      _
    $region3: #{tpu_custom_call.1} parent=1 // loop_header
      %s14 = sphi 0, %s18
      %p15 = scmp.ge.s32.totalorder %s14, 6
      %s21 = sphi 0, %s33
      %s22 = sphi 0, %s29
      %s23 = sphi 0, %s21
      %s24 = sphi 0, %s22
      %s25 = sphi 0, %s23
      %s26 = sphi 0, %s24
      %s38 = sphi 0, %s40
      %s41 = sphi 0, %s38
      %s42 = sphi 0, %s41
      %s58 = sphi 0, %s42
      %s64 = sphi 0, %s66
      %s67 = sphi 0, %s64
      %s68 = sphi 0, %s67
      %s84 = sphi 0, %s68
      %s90 = sphi 0, %s92
      %s93 = sphi 0, %s90
      %s94 = sphi 0, %s93
      %s110 = sphi 0, %s94
      %s116 = sphi 0, %s118
      %s119 = sphi 0, %s116
      %s120 = sphi 0, %s119
      %s136 = sphi 0, %s120
      %s142 = sphi 0, %s144
      %s145 = sphi 0, %s142
      %s146 = sphi 0, %s145
      %s162 = sphi 0, %s146
    $region4: #{tpu_custom_call.1} parent=1 // loop_header_branch
      %17 = sbr.rel (%p15) target = $region8
    $region5: #{tpu_custom_call.1} parent=1 // loop_body
      %s19 = ssub.s32 %s14, 1
      %s20 = ssub.s32 %s14, 2
      %s27 = sadd.s32 1, %s22
      %p28 = scmp.ge.s32.totalorder %s27, 1
      %s29 = scalar_select %p28, 0, %s27
      %s30 = sadd.s32 1, %s21
      %s31 = scalar_select %p28, %s30, %s21
      %p32 = scmp.ge.s32.totalorder %s31, 4
      %s33 = scalar_select %p32, 0, %s31
      %s34 = ssub.s32 %s21, %s33
      %s35 = ssub.s32 %s22, %s29
      %s36 = sor.u32 %s34, %s35
      %p37 = scmp.eq.s32.totalorder %s36, 0
      %s39 = sadd.s32 %s38, 1
      %s40 = scalar_select %p37, %s38, %s39
      %p43 = pneg %p37
      %p44 = scmp.eq.s32.totalorder %s14, 3
      %p45 = por %p43, %p44
      %p46 = scmp.ne.s32.totalorder %s38, %s41
      %p47 = scmp.eq.s32.totalorder %s14, 0
      %p48 = por %p46, %p47
      %p49 = scmp.ne.s32.totalorder %s38, %s41
      %p50 = scmp.eq.s32.totalorder %s19, 3
      %p51 = por %p49, %p50
      %p52 = scmp.ne.s32.totalorder %s41, %s42
      %p53 = scmp.eq.s32.totalorder %s19, 0
      %p54 = por %p52, %p53
      %p55 = scmp.ne.s32.totalorder %s41, %s42
      %p56 = scmp.eq.s32.totalorder %s20, 3
      %p57 = por %p55, %p56
      %p59 = scmp.ne.s32.totalorder %s42, %s58
      %p60 = scmp.eq.s32.totalorder %s20, 0
      %p61 = por %p59, %p60
      %s62 = ssub.s32 %s22, %s29
      %p63 = scmp.eq.s32.totalorder %s62, 0
      %s65 = sadd.s32 %s64, 1
      %s66 = scalar_select %p63, %s64, %s65
      %p69 = pneg %p63
      %p70 = scmp.eq.s32.totalorder %s14, 3
      %p71 = por %p69, %p70
      %p72 = scmp.ne.s32.totalorder %s64, %s67
      %p73 = scmp.eq.s32.totalorder %s14, 0
      %p74 = por %p72, %p73
      %p75 = scmp.ne.s32.totalorder %s64, %s67
      %p76 = scmp.eq.s32.totalorder %s19, 3
      %p77 = por %p75, %p76
      %p78 = scmp.ne.s32.totalorder %s67, %s68
      %p79 = scmp.eq.s32.totalorder %s19, 0
      %p80 = por %p78, %p79
      %p81 = scmp.ne.s32.totalorder %s67, %s68
      %p82 = scmp.eq.s32.totalorder %s20, 3
      %p83 = por %p81, %p82
      %p85 = scmp.ne.s32.totalorder %s68, %s84
      %p86 = scmp.eq.s32.totalorder %s20, 0
      %p87 = por %p85, %p86
      %s88 = ssub.s32 %s21, %s33
      %p89 = scmp.eq.s32.totalorder %s88, 0
      %s91 = sadd.s32 %s90, 1
      %s92 = scalar_select %p89, %s90, %s91
      %p95 = pneg %p89
      %p96 = scmp.eq.s32.totalorder %s14, 3
      %p97 = por %p95, %p96
      %p98 = scmp.ne.s32.totalorder %s90, %s93
      %p99 = scmp.eq.s32.totalorder %s14, 0
      %p100 = por %p98, %p99
      %p101 = scmp.ne.s32.totalorder %s90, %s93
      %p102 = scmp.eq.s32.totalorder %s19, 3
      %p103 = por %p101, %p102
      %p104 = scmp.ne.s32.totalorder %s93, %s94
      %p105 = scmp.eq.s32.totalorder %s19, 0
      %p106 = por %p104, %p105
      %p107 = scmp.ne.s32.totalorder %s93, %s94
      %p108 = scmp.eq.s32.totalorder %s20, 3
      %p109 = por %p107, %p108
      %p111 = scmp.ne.s32.totalorder %s94, %s110
      %p112 = scmp.eq.s32.totalorder %s20, 0
      %p113 = por %p111, %p112
      %s114 = ssub.s32 %s21, %s33
      %p115 = scmp.eq.s32.totalorder %s114, 0
      %s117 = sadd.s32 %s116, 1
      %s118 = scalar_select %p115, %s116, %s117
      %p121 = pneg %p115
      %p122 = scmp.eq.s32.totalorder %s14, 3
      %p123 = por %p121, %p122
      %p124 = scmp.ne.s32.totalorder %s116, %s119
      %p125 = scmp.eq.s32.totalorder %s14, 0
      %p126 = por %p124, %p125
      %p127 = scmp.ne.s32.totalorder %s116, %s119
      %p128 = scmp.eq.s32.totalorder %s19, 3
      %p129 = por %p127, %p128
      %p130 = scmp.ne.s32.totalorder %s119, %s120
      %p131 = scmp.eq.s32.totalorder %s19, 0
      %p132 = por %p130, %p131
      %p133 = scmp.ne.s32.totalorder %s119, %s120
      %p134 = scmp.eq.s32.totalorder %s20, 3
      %p135 = por %p133, %p134
      %p137 = scmp.ne.s32.totalorder %s120, %s136
      %p138 = scmp.eq.s32.totalorder %s20, 0
      %p139 = por %p137, %p138
      %s140 = ssub.s32 %s21, %s33
      %p141 = scmp.eq.s32.totalorder %s140, 0
      %s143 = sadd.s32 %s142, 1
      %s144 = scalar_select %p141, %s142, %s143
      %p147 = pneg %p141
      %p148 = scmp.eq.s32.totalorder %s14, 3
      %p149 = por %p147, %p148
      %p150 = scmp.ne.s32.totalorder %s142, %s145
      %p151 = scmp.eq.s32.totalorder %s14, 0
      %p152 = por %p150, %p151
      %p153 = scmp.ne.s32.totalorder %s142, %s145
      %p154 = scmp.eq.s32.totalorder %s19, 3
      %p155 = por %p153, %p154
      %p156 = scmp.ne.s32.totalorder %s145, %s146
      %p157 = scmp.eq.s32.totalorder %s19, 0
      %p158 = por %p156, %p157
      %p159 = scmp.ne.s32.totalorder %s145, %s146
      %p160 = scmp.eq.s32.totalorder %s20, 3
      %p161 = por %p159, %p160
      %p163 = scmp.ne.s32.totalorder %s146, %s162
      %p164 = scmp.eq.s32.totalorder %s20, 0
      %p165 = por %p163, %p164
      %p166 = scmp.le.s32.totalorder 1, %s14
      %p167 = scmp.lt.s32.totalorder %s14, 5
      %p168 = pnand %p166, %p167
      %p169 = pneg %p168
      // Predicated region
      $region9: #{tpu_custom_call.1} parent=5 // pred_check
        _
      $region10: #{tpu_custom_call.1} parent=5 // pred_check_branch
        %171 = sbr.rel (%p168) target = $region12
      $region11: #{tpu_custom_call.1} parent=5 // pred_region
        %s172 = ssub.s32 %s14, 1
        // Predicated region
        $region13: #{tpu_custom_call.1} parent=11 // pred_check
          %p173 = pneg %p80
        $region14: #{tpu_custom_call.1} parent=11 // pred_check_branch
          %175 = sbr.rel (%p173) target = $region16
        $region15: #{tpu_custom_call.1} parent=11 // pred_region
          %s176 = smul.u32 16, %s24
          %p177 = scmp.lt.s32.totalorder %s176, 15
          %s178 = scalar_select %p177, %s176, 15
          %s179 = smul.addr %s178, 4
          %s180 = scalar_lea.vmem %s1, %s179
          %s181 = smul.u32 16, %s24
        $region16: #{tpu_custom_call.1} parent=11 // pred_fallthru
          _
      $region12: #{tpu_custom_call.1} parent=5 // pred_fallthru
        _
      %p182 = scmp.lt.s32.totalorder %s14, 4
      // Predicated region
      $region17: #{tpu_custom_call.1} parent=5 // pred_check
        %p183 = pneg %p182
      $region18: #{tpu_custom_call.1} parent=5 // pred_check_branch
        %185 = sbr.rel (%p183) target = $region20
      $region19: #{tpu_custom_call.1} parent=5 // pred_region
        // Predicated region
        $region21: #{tpu_custom_call.1} parent=19 // pred_check
          %p186 = pneg %p48
        $region22: #{tpu_custom_call.1} parent=19 // pred_check_branch
          %188 = sbr.rel (%p186) target = $region24
        $region23: #{tpu_custom_call.1} parent=19 // pred_region
          %s189 = sand.u32 %s38, 1
          %s190 = scalar_lea.sflag [#allocation4], %s189
          %s191 = sand.u32 %s38, 1
          %s192 = smul.addr %s191, 64
          %s193 = scalar_lea.vmem [#allocation3], %s192
          %s194 = smul.u32 16, %s21
          %196 = vsyncadd %s190, 0
          %s197 = sadd.s32 %s22, %s194
          %s198 = smul.addr %s197, 4
          %s199 = scalar_lea.hbm %s0, %s198
          %s200 = sshll.u32 %s199, 4
          %s201 = int_to_ptr.hbm [resolvable:$true] %s200
          %s202 = sshll.u32 %s193, 4
          %s203 = int_to_ptr.vmem [resolvable:$true] %s202
          %208 = dma.hbm_to_vmem [thread:$0]  %s201, 1024, %s203, %s190, 64, 64, 4
        $region24: #{tpu_custom_call.1} parent=19 // pred_fallthru
          _
      $region20: #{tpu_custom_call.1} parent=5 // pred_fallthru
        _
      %p209 = scmp.le.s32.totalorder 1, %s14
      %p210 = scmp.lt.s32.totalorder %s14, 5
      %p211 = pnand %p209, %p210
      %p212 = pneg %p211
      // Predicated region
      $region25: #{tpu_custom_call.1} parent=5 // pred_check
        _
      $region26: #{tpu_custom_call.1} parent=5 // pred_check_branch
        %214 = sbr.rel (%p211) target = $region28
      $region27: #{tpu_custom_call.1} parent=5 // pred_region
        %s215 = ssub.s32 %s14, 1
        %s216 = sand.u32 %s41, 1
        %s217 = scalar_lea.sflag [#allocation4], %s216
        %s218 = sand.u32 %s41, 1
        %s219 = smul.addr %s218, 64
        %s220 = scalar_lea.vmem [#allocation3], %s219
        // Predicated region
        $region29: #{tpu_custom_call.1} parent=27 // pred_check
          %p221 = pneg %p54
        $region30: #{tpu_custom_call.1} parent=27 // pred_check_branch
          %223 = sbr.rel (%p221) target = $region32
        $region31: #{tpu_custom_call.1} parent=27 // pred_region
          %225 = dma.done %s217, 1024
        $region32: #{tpu_custom_call.1} parent=27 // pred_fallthru
          _
        %s226 = sand.u32 %s41, 1
        %s227 = scalar_lea.sflag [#allocation4], %s226
        %s228 = sand.u32 %s41, 1
        %s229 = smul.addr %s228, 64
        %s230 = scalar_lea.vmem [#allocation3], %s229
        %p231 = pneg %p54
        %p232 = pneg %p51
        %s233 = smul.u32 16, %s24
        %p234 = scmp.lt.s32.totalorder %s233, 15
        %s235 = scalar_select %p234, %s233, 15
        %s236 = smul.addr %s235, 4
        %s237 = scalar_lea.vmem %s1, %s236
        %p238 = pneg %p80
        %p239 = pneg %p77
        %p240 = pneg %p106
        %p241 = pneg %p103
        %s242 = smul.u32 16, %s23
        %p243 = scmp.lt.s32.totalorder %s242, 63
        %s244 = scalar_select %p243, %s242, 63
        %s245 = smul.addr %s244, 4
        %s246 = scalar_lea.vmem %s2, %s245
        %p247 = pneg %p132
        %p248 = pneg %p129
        %p249 = scmp.lt.s32.totalorder %s23, 3
        %s250 = scalar_select %p249, %s23, 3
        %s251 = smul.addr %s250, 8
        %s252 = scalar_lea.vmem %s3, %s251
        %p253 = pneg %p158
        %p254 = pneg %p155
        %p255 = scmp.lt.s32.totalorder %s23, 3
        %s256 = scalar_select %p255, %s23, 3
        %s257 = smul.addr %s256, 8
        %s258 = scalar_lea.vmem %s4, %s257
        %s259 = smul.u32 16, %s23
        %s260 = smul.u32 16, %s24
        %p261 = scmp.lt.s32.totalorder %s260, 15
        %s262 = scalar_select %p261, %s260, 15
        %s263 = smul.addr %s262, 4
        %s264 = scalar_lea.vmem %s1, %s263
        %s265 = smul.u32 16, %s24
        %s266 = smul.u32 16, %s23
        %p267 = scmp.lt.s32.totalorder %s266, 63
        %s268 = scalar_select %p267, %s266, 63
        %s269 = smul.addr %s268, 4
        %s270 = scalar_lea.vmem %s2, %s269
        %s271 = smul.u32 16, %s23
        %p272 = scmp.lt.s32.totalorder %s23, 3
        %s273 = scalar_select %p272, %s23, 3
        %s274 = smul.addr %s273, 8
        %s275 = scalar_lea.vmem %s3, %s274
        %p276 = scmp.lt.s32.totalorder %s23, 3
        %s277 = scalar_select %p276, %s23, 3
        %s278 = smul.addr %s277, 8
        %s279 = scalar_lea.vmem %s4, %s278
        %p280 = scmp.eq.s32.totalorder %s24, 0
        // Predicated region
        $region33: #{tpu_custom_call.1} parent=27 // pred_check
          %p281 = pneg %p280
        $region34: #{tpu_custom_call.1} parent=27 // pred_check_branch
          %283 = sbr.rel (%p281) target = $region36
        $region35: #{tpu_custom_call.1} parent=27 // pred_region
          %vm284 = vcmask 31744
          %285 = vst.msk [vmem:[#allocation2] sm:$0xff] %vm284, 0.0
          %286 = vst.msk [vmem:[#allocation2 + $0x8] sm:$0xff] %vm284, 0.0
          %287 = vst.msk [vmem:[#allocation2 + $0x10] sm:$0xff] %vm284, 0.0
          %288 = vst.msk [vmem:[#allocation2 + $0x18] sm:$0xff] %vm284, 0.0
          %289 = vst.msk [vmem:[#allocation2 + $0x20] sm:$0xff] %vm284, 0.0
          %290 = vst.msk [vmem:[#allocation2 + $0x28] sm:$0xff] %vm284, 0.0
          %291 = vst.msk [vmem:[#allocation2 + $0x30] sm:$0xff] %vm284, 0.0
          %292 = vst.msk [vmem:[#allocation2 + $0x38] sm:$0xff] %vm284, 0.0
          %293 = vst.msk [vmem:[#allocation2 + $0x40] sm:$0xff] %vm284, 0.0
          %294 = vst.msk [vmem:[#allocation2 + $0x48] sm:$0xff] %vm284, 0.0
          %295 = vst.msk [vmem:[#allocation2 + $0x50] sm:$0xff] %vm284, 0.0
          %296 = vst.msk [vmem:[#allocation2 + $0x58] sm:$0xff] %vm284, 0.0
          %297 = vst.msk [vmem:[#allocation2 + $0x60] sm:$0xff] %vm284, 0.0
          %298 = vst.msk [vmem:[#allocation2 + $0x68] sm:$0xff] %vm284, 0.0
          %299 = vst.msk [vmem:[#allocation2 + $0x70] sm:$0xff] %vm284, 0.0
          %300 = vst.msk [vmem:[#allocation2 + $0x78] sm:$0xff] %vm284, 0.0
        $region36: #{tpu_custom_call.1} parent=27 // pred_fallthru
          _
        %v301 = vld [vmem:[#allocation2] sm:$0xff]
        %v302 = vld [vmem:[#allocation2 + $0x8] sm:$0xff]
        %v303 = vld [vmem:[#allocation2 + $0x10] sm:$0xff]
        %v304 = vld [vmem:[#allocation2 + $0x18] sm:$0xff]
        %v305 = vld [vmem:[#allocation2 + $0x20] sm:$0xff]
        %v306 = vld [vmem:[#allocation2 + $0x28] sm:$0xff]
        %v307 = vld [vmem:[#allocation2 + $0x30] sm:$0xff]
        %v308 = vld [vmem:[#allocation2 + $0x38] sm:$0xff]
        %v309 = vld [vmem:[#allocation2 + $0x40] sm:$0xff]
        %v310 = vld [vmem:[#allocation2 + $0x48] sm:$0xff]
        %v311 = vld [vmem:[#allocation2 + $0x50] sm:$0xff]
        %v312 = vld [vmem:[#allocation2 + $0x58] sm:$0xff]
        %v313 = vld [vmem:[#allocation2 + $0x60] sm:$0xff]
        %v314 = vld [vmem:[#allocation2 + $0x68] sm:$0xff]
        %v315 = vld [vmem:[#allocation2 + $0x70] sm:$0xff]
        %v316 = vld [vmem:[#allocation2 + $0x78] sm:$0xff]
        %v317 = vld [vmem:[%s220] sm:$0xf]
        %v318 = vld [vmem:[%s220 + $0x4] sm:$0xf]
        %v319 = vld [vmem:[%s220 + $0x8] sm:$0xf]
        %v320 = vld [vmem:[%s220 + $0xc] sm:$0xf]
        %v321 = vld [vmem:[%s220 + $0x10] sm:$0xf]
        %v322 = vld [vmem:[%s220 + $0x14] sm:$0xf]
        %v323 = vld [vmem:[%s220 + $0x18] sm:$0xf]
        %v324 = vld [vmem:[%s220 + $0x1c] sm:$0xf]
        %v325 = vld [vmem:[%s220 + $0x20] sm:$0xf]
        %v326 = vld [vmem:[%s220 + $0x24] sm:$0xf]
        %v327 = vld [vmem:[%s220 + $0x28] sm:$0xf]
        %v328 = vld [vmem:[%s220 + $0x2c] sm:$0xf]
        %v329 = vld [vmem:[%s220 + $0x30] sm:$0xf]
        %v330 = vld [vmem:[%s220 + $0x34] sm:$0xf]
        %v331 = vld [vmem:[%s220 + $0x38] sm:$0xf]
        %v332 = vld [vmem:[%s220 + $0x3c] sm:$0xf]
        %v333 = vld [vmem:[%s264] sm:$0xf]
        %v334 = vld [vmem:[%s264 + $0x4] sm:$0xf]
        %v335 = vld [vmem:[%s264 + $0x8] sm:$0xf]
        %v336 = vld [vmem:[%s264 + $0xc] sm:$0xf]
        %v337 = vld [vmem:[%s264 + $0x10] sm:$0xf]
        %v338 = vld [vmem:[%s264 + $0x14] sm:$0xf]
        %v339 = vld [vmem:[%s264 + $0x18] sm:$0xf]
        %v340 = vld [vmem:[%s264 + $0x1c] sm:$0xf]
        %v341 = vld [vmem:[%s264 + $0x20] sm:$0xf]
        %v342 = vld [vmem:[%s264 + $0x24] sm:$0xf]
        %v343 = vld [vmem:[%s264 + $0x28] sm:$0xf]
        %v344 = vld [vmem:[%s264 + $0x2c] sm:$0xf]
        %v345 = vld [vmem:[%s264 + $0x30] sm:$0xf]
        %v346 = vld [vmem:[%s264 + $0x34] sm:$0xf]
        %v347 = vld [vmem:[%s264 + $0x38] sm:$0xf]
        %v348 = vld [vmem:[%s264 + $0x3c] sm:$0xf]
        %v365 = vunpack.c.l.b16 %v317
        %v366 = vunpack.c.l.b16 %v318
        %v367 = vunpack.c.l.b16 %v319
        %v368 = vunpack.c.l.b16 %v320
        %v369 = vunpack.c.l.b16 %v321
        %v370 = vunpack.c.l.b16 %v322
        %v371 = vunpack.c.l.b16 %v323
        %v372 = vunpack.c.l.b16 %v324
        %v373 = vunpack.c.l.b16 %v325
        %v374 = vunpack.c.l.b16 %v326
        %v375 = vunpack.c.l.b16 %v327
        %v376 = vunpack.c.l.b16 %v328
        %v377 = vunpack.c.l.b16 %v329
        %v378 = vunpack.c.l.b16 %v330
        %v379 = vunpack.c.l.b16 %v331
        %v380 = vunpack.c.l.b16 %v332
        %v381 = vpack.c.b16 %v366, %v365
        %v382 = vpack.c.b16 %v368, %v367
        %v383 = vpack.c.b16 %v370, %v369
        %v384 = vpack.c.b16 %v372, %v371
        %v385 = vpack.c.b16 %v374, %v373
        %v386 = vpack.c.b16 %v376, %v375
        %v387 = vpack.c.b16 %v378, %v377
        %v388 = vpack.c.b16 %v380, %v379
        %v413 = vunpack.c.l.b16 %v333
        %v414 = vunpack.c.l.b16 %v334
        %v415 = vunpack.c.l.b16 %v335
        %v416 = vunpack.c.l.b16 %v336
        %v417 = vunpack.c.l.b16 %v337
        %v418 = vunpack.c.l.b16 %v338
        %v419 = vunpack.c.l.b16 %v339
        %v420 = vunpack.c.l.b16 %v340
        %v421 = vunpack.c.l.b16 %v341
        %v422 = vunpack.c.l.b16 %v342
        %v423 = vunpack.c.l.b16 %v343
        %v424 = vunpack.c.l.b16 %v344
        %v425 = vunpack.c.l.b16 %v345
        %v426 = vunpack.c.l.b16 %v346
        %v427 = vunpack.c.l.b16 %v347
        %v428 = vunpack.c.l.b16 %v348
        %v429 = vpack.c.b16 %v414, %v413
        %v430 = vpack.c.b16 %v416, %v415
        %v431 = vpack.c.b16 %v418, %v417
        %v432 = vpack.c.b16 %v420, %v419
        %v433 = vpack.c.b16 %v422, %v421
        %v434 = vpack.c.b16 %v424, %v423
        %v435 = vpack.c.b16 %v426, %v425
        %v436 = vpack.c.b16 %v428, %v427
        %445 = vmatpush.bf16.msra.mxu0 %v436
        %446 = vmatpush.bf16.msra.mxu0 %v435
        %447 = vmatpush.bf16.msra.mxu0 %v434
        %448 = vmatpush.bf16.msra.mxu0 %v433
        %449 = vmatpush.bf16.msra.mxu0 %v432
        %450 = vmatpush.bf16.msra.mxu0 %v431
        %451 = vmatpush.bf16.msra.mxu0 %v430
        %452 = vmatpush.bf16.msra.mxu0 %v429
        %453 = vmatmul.bf16.gmra.mxu0 %v381
        %v454 = vpop.f32.mrf.mxu0
        %v455 = vadd.f32 0.0, %v454
        %v456 = vpop.f32.mrf.mxu0
        %v457 = vadd.f32 0.0, %v456
        %458 = vmatmul.bf16.gmra.mxu0 %v382
        %v459 = vpop.f32.mrf.mxu0
        %v460 = vadd.f32 0.0, %v459
        %v461 = vpop.f32.mrf.mxu0
        %v462 = vadd.f32 0.0, %v461
        %463 = vmatmul.bf16.gmra.mxu0 %v383
        %v464 = vpop.f32.mrf.mxu0
        %v465 = vadd.f32 0.0, %v464
        %v466 = vpop.f32.mrf.mxu0
        %v467 = vadd.f32 0.0, %v466
        %468 = vmatmul.bf16.gmra.mxu0 %v384
        %v469 = vpop.f32.mrf.mxu0
        %v470 = vadd.f32 0.0, %v469
        %v471 = vpop.f32.mrf.mxu0
        %v472 = vadd.f32 0.0, %v471
        %473 = vmatmul.bf16.gmra.mxu0 %v385
        %v474 = vpop.f32.mrf.mxu0
        %v475 = vadd.f32 0.0, %v474
        %v476 = vpop.f32.mrf.mxu0
        %v477 = vadd.f32 0.0, %v476
        %478 = vmatmul.bf16.gmra.mxu0 %v386
        %v479 = vpop.f32.mrf.mxu0
        %v480 = vadd.f32 0.0, %v479
        %v481 = vpop.f32.mrf.mxu0
        %v482 = vadd.f32 0.0, %v481
        %483 = vmatmul.bf16.gmra.mxu0 %v387
        %v484 = vpop.f32.mrf.mxu0
        %v485 = vadd.f32 0.0, %v484
        %v486 = vpop.f32.mrf.mxu0
        %v487 = vadd.f32 0.0, %v486
        %488 = vmatmul.bf16.gmra.mxu0 %v388
        %v489 = vpop.f32.mrf.mxu0
        %v490 = vadd.f32 0.0, %v489
        %v491 = vpop.f32.mrf.mxu0
        %v492 = vadd.f32 0.0, %v491
        %493 = vdwg.mxu0
        %v494 = vadd.f32 %v301, %v455
        %v495 = vadd.f32 %v302, %v457
        %v496 = vadd.f32 %v303, %v460
        %v497 = vadd.f32 %v304, %v462
        %v498 = vadd.f32 %v305, %v465
        %v499 = vadd.f32 %v306, %v467
        %v500 = vadd.f32 %v307, %v470
        %v501 = vadd.f32 %v308, %v472
        %v502 = vadd.f32 %v309, %v475
        %v503 = vadd.f32 %v310, %v477
        %v504 = vadd.f32 %v311, %v480
        %v505 = vadd.f32 %v312, %v482
        %v506 = vadd.f32 %v313, %v485
        %v507 = vadd.f32 %v314, %v487
        %v508 = vadd.f32 %v315, %v490
        %v509 = vadd.f32 %v316, %v492
        %vm510 = vcmask 31744
        %511 = vst.msk [vmem:[#allocation2] sm:$0xff] %vm510, %v494
        %512 = vst.msk [vmem:[#allocation2 + $0x8] sm:$0xff] %vm510, %v495
        %513 = vst.msk [vmem:[#allocation2 + $0x10] sm:$0xff] %vm510, %v496
        %514 = vst.msk [vmem:[#allocation2 + $0x18] sm:$0xff] %vm510, %v497
        %515 = vst.msk [vmem:[#allocation2 + $0x20] sm:$0xff] %vm510, %v498
        %516 = vst.msk [vmem:[#allocation2 + $0x28] sm:$0xff] %vm510, %v499
        %517 = vst.msk [vmem:[#allocation2 + $0x30] sm:$0xff] %vm510, %v500
        %518 = vst.msk [vmem:[#allocation2 + $0x38] sm:$0xff] %vm510, %v501
        %519 = vst.msk [vmem:[#allocation2 + $0x40] sm:$0xff] %vm510, %v502
        %520 = vst.msk [vmem:[#allocation2 + $0x48] sm:$0xff] %vm510, %v503
        %521 = vst.msk [vmem:[#allocation2 + $0x50] sm:$0xff] %vm510, %v504
        %522 = vst.msk [vmem:[#allocation2 + $0x58] sm:$0xff] %vm510, %v505
        %523 = vst.msk [vmem:[#allocation2 + $0x60] sm:$0xff] %vm510, %v506
        %524 = vst.msk [vmem:[#allocation2 + $0x68] sm:$0xff] %vm510, %v507
        %525 = vst.msk [vmem:[#allocation2 + $0x70] sm:$0xff] %vm510, %v508
        %526 = vst.msk [vmem:[#allocation2 + $0x78] sm:$0xff] %vm510, %v509
        // Predicated region
        $region37: #{tpu_custom_call.1} parent=27 // pred_check
          %p527 = pneg %p280
        $region38: #{tpu_custom_call.1} parent=27 // pred_check_branch
          %529 = sbr.rel (%p527) target = $region40
        $region39: #{tpu_custom_call.1} parent=27 // pred_region
          %v530 = vld [vmem:[#allocation2] sm:$0xff]
          %v531 = vld [vmem:[#allocation2 + $0x8] sm:$0xff]
          %v532 = vld [vmem:[#allocation2 + $0x10] sm:$0xff]
          %v533 = vld [vmem:[#allocation2 + $0x18] sm:$0xff]
          %v534 = vld [vmem:[#allocation2 + $0x20] sm:$0xff]
          %v535 = vld [vmem:[#allocation2 + $0x28] sm:$0xff]
          %v536 = vld [vmem:[#allocation2 + $0x30] sm:$0xff]
          %v537 = vld [vmem:[#allocation2 + $0x38] sm:$0xff]
          %v538 = vld [vmem:[#allocation2 + $0x40] sm:$0xff]
          %v539 = vld [vmem:[#allocation2 + $0x48] sm:$0xff]
          %v540 = vld [vmem:[#allocation2 + $0x50] sm:$0xff]
          %v541 = vld [vmem:[#allocation2 + $0x58] sm:$0xff]
          %v542 = vld [vmem:[#allocation2 + $0x60] sm:$0xff]
          %v543 = vld [vmem:[#allocation2 + $0x68] sm:$0xff]
          %v544 = vld [vmem:[#allocation2 + $0x70] sm:$0xff]
          %v545 = vld [vmem:[#allocation2 + $0x78] sm:$0xff]
          %v546 = vpack.c.bf16 %v530, %v530
          %v547 = vpack.c.bf16 %v531, %v531
          %v548 = vpack.c.bf16 %v532, %v532
          %v549 = vpack.c.bf16 %v533, %v533
          %v550 = vpack.c.bf16 %v534, %v534
          %v551 = vpack.c.bf16 %v535, %v535
          %v552 = vpack.c.bf16 %v536, %v536
          %v553 = vpack.c.bf16 %v537, %v537
          %v554 = vpack.c.bf16 %v538, %v538
          %v555 = vpack.c.bf16 %v539, %v539
          %v556 = vpack.c.bf16 %v540, %v540
          %v557 = vpack.c.bf16 %v541, %v541
          %v558 = vpack.c.bf16 %v542, %v542
          %v559 = vpack.c.bf16 %v543, %v543
          %v560 = vpack.c.bf16 %v544, %v544
          %v561 = vpack.c.bf16 %v545, %v545
          %vm562 = vcmask 27648
          %563 = vst.msk [vmem:[%s270] sm:$0xf] %vm562, %v546
          %564 = vst.msk [vmem:[%s270 + $0x4] sm:$0xf] %vm562, %v547
          %565 = vst.msk [vmem:[%s270 + $0x8] sm:$0xf] %vm562, %v548
          %566 = vst.msk [vmem:[%s270 + $0xc] sm:$0xf] %vm562, %v549
          %567 = vst.msk [vmem:[%s270 + $0x10] sm:$0xf] %vm562, %v550
          %568 = vst.msk [vmem:[%s270 + $0x14] sm:$0xf] %vm562, %v551
          %569 = vst.msk [vmem:[%s270 + $0x18] sm:$0xf] %vm562, %v552
          %570 = vst.msk [vmem:[%s270 + $0x1c] sm:$0xf] %vm562, %v553
          %571 = vst.msk [vmem:[%s270 + $0x20] sm:$0xf] %vm562, %v554
          %572 = vst.msk [vmem:[%s270 + $0x24] sm:$0xf] %vm562, %v555
          %573 = vst.msk [vmem:[%s270 + $0x28] sm:$0xf] %vm562, %v556
          %574 = vst.msk [vmem:[%s270 + $0x2c] sm:$0xf] %vm562, %v557
          %575 = vst.msk [vmem:[%s270 + $0x30] sm:$0xf] %vm562, %v558
          %576 = vst.msk [vmem:[%s270 + $0x34] sm:$0xf] %vm562, %v559
          %577 = vst.msk [vmem:[%s270 + $0x38] sm:$0xf] %vm562, %v560
          %578 = vst.msk [vmem:[%s270 + $0x3c] sm:$0xf] %vm562, %v561
          %v579 = vsel %vm510, %v530, 0.0
          %v580 = vsel %vm510, %v531, 0.0
          %v581 = vadd.f32 %v579, %v580
          %v582 = vsel %vm510, %v532, 0.0
          %v583 = vadd.f32 %v581, %v582
          %v584 = vsel %vm510, %v533, 0.0
          %v585 = vadd.f32 %v583, %v584
          %v586 = vsel %vm510, %v534, 0.0
          %v587 = vadd.f32 %v585, %v586
          %v588 = vsel %vm510, %v535, 0.0
          %v589 = vadd.f32 %v587, %v588
          %v590 = vsel %vm510, %v536, 0.0
          %v591 = vadd.f32 %v589, %v590
          %v592 = vsel %vm510, %v537, 0.0
          %v593 = vadd.f32 %v591, %v592
          %v594 = vsel %vm510, %v538, 0.0
          %v595 = vadd.f32 %v593, %v594
          %v596 = vsel %vm510, %v539, 0.0
          %v597 = vadd.f32 %v595, %v596
          %v598 = vsel %vm510, %v540, 0.0
          %v599 = vadd.f32 %v597, %v598
          %v600 = vsel %vm510, %v541, 0.0
          %v601 = vadd.f32 %v599, %v600
          %v602 = vsel %vm510, %v542, 0.0
          %v603 = vadd.f32 %v601, %v602
          %v604 = vsel %vm510, %v543, 0.0
          %v605 = vadd.f32 %v603, %v604
          %v606 = vsel %vm510, %v544, 0.0
          %v607 = vadd.f32 %v605, %v606
          %v608 = vsel %vm510, %v545, 0.0
          %v609 = vadd.f32 %v607, %v608
          %v610 = vrot.slane %v609, 4
          %v611 = vadd.f32 %v609, %v610
          %v612 = vrot.slane %v611, 2
          %v613 = vadd.f32 %v611, %v612
          %v614 = vrot.slane %v613, 1
          %v615 = vadd.f32 %v613, %v614
          %v616 = vmul.f32 %v530, %v530
          %v617 = vmul.f32 %v531, %v531
          %v618 = vmul.f32 %v532, %v532
          %v619 = vmul.f32 %v533, %v533
          %v620 = vmul.f32 %v534, %v534
          %v621 = vmul.f32 %v535, %v535
          %v622 = vmul.f32 %v536, %v536
          %v623 = vmul.f32 %v537, %v537
          %v624 = vmul.f32 %v538, %v538
          %v625 = vmul.f32 %v539, %v539
          %v626 = vmul.f32 %v540, %v540
          %v627 = vmul.f32 %v541, %v541
          %v628 = vmul.f32 %v542, %v542
          %v629 = vmul.f32 %v543, %v543
          %v630 = vmul.f32 %v544, %v544
          %v631 = vmul.f32 %v545, %v545
          %v632 = vsel %vm510, %v616, 0.0
          %v633 = vsel %vm510, %v617, 0.0
          %v634 = vadd.f32 %v632, %v633
          %v635 = vsel %vm510, %v618, 0.0
          %v636 = vadd.f32 %v634, %v635
          %v637 = vsel %vm510, %v619, 0.0
          %v638 = vadd.f32 %v636, %v637
          %v639 = vsel %vm510, %v620, 0.0
          %v640 = vadd.f32 %v638, %v639
          %v641 = vsel %vm510, %v621, 0.0
          %v642 = vadd.f32 %v640, %v641
          %v643 = vsel %vm510, %v622, 0.0
          %v644 = vadd.f32 %v642, %v643
          %v645 = vsel %vm510, %v623, 0.0
          %v646 = vadd.f32 %v644, %v645
          %v647 = vsel %vm510, %v624, 0.0
          %v648 = vadd.f32 %v646, %v647
          %v649 = vsel %vm510, %v625, 0.0
          %v650 = vadd.f32 %v648, %v649
          %v651 = vsel %vm510, %v626, 0.0
          %v652 = vadd.f32 %v650, %v651
          %v653 = vsel %vm510, %v627, 0.0
          %v654 = vadd.f32 %v652, %v653
          %v655 = vsel %vm510, %v628, 0.0
          %v656 = vadd.f32 %v654, %v655
          %v657 = vsel %vm510, %v629, 0.0
          %v658 = vadd.f32 %v656, %v657
          %v659 = vsel %vm510, %v630, 0.0
          %v660 = vadd.f32 %v658, %v659
          %v661 = vsel %vm510, %v631, 0.0
          %v662 = vadd.f32 %v660, %v661
          %v663 = vrot.slane %v662, 4
          %v664 = vadd.f32 %v662, %v663
          %v665 = vrot.slane %v664, 2
          %v666 = vadd.f32 %v664, %v665
          %v667 = vrot.slane %v666, 1
          %v668 = vadd.f32 %v666, %v667
          %669 = vst.msk [vmem:[%s275] sm:$0xff] %vm510, %v615
          %670 = vst.msk [vmem:[%s279] sm:$0xff] %vm510, %v668
        $region40: #{tpu_custom_call.1} parent=27 // pred_fallthru
          _
        %s671 = smul.u32 16, %s23
        %p672 = scmp.lt.s32.totalorder %s671, 63
        %s673 = scalar_select %p672, %s671, 63
        %s674 = smul.addr %s673, 4
        %s675 = scalar_lea.vmem %s2, %s674
        %p676 = scmp.lt.s32.totalorder %s23, 3
        %s677 = scalar_select %p676, %s23, 3
        %s678 = smul.addr %s677, 8
        %s679 = scalar_lea.vmem %s3, %s678
        %p680 = scmp.lt.s32.totalorder %s23, 3
        %s681 = scalar_select %p680, %s23, 3
        %s682 = smul.addr %s681, 8
        %s683 = scalar_lea.vmem %s4, %s682
        // Predicated region
        $region41: #{tpu_custom_call.1} parent=27 // pred_check
          %p684 = pneg %p103
        $region42: #{tpu_custom_call.1} parent=27 // pred_check_branch
          %686 = sbr.rel (%p684) target = $region44
        $region43: #{tpu_custom_call.1} parent=27 // pred_region
          %s687 = smul.u32 16, %s23
        $region44: #{tpu_custom_call.1} parent=27 // pred_fallthru
          _
        // Predicated region
        $region45: #{tpu_custom_call.1} parent=27 // pred_check
          %p688 = pneg %p129
        $region46: #{tpu_custom_call.1} parent=27 // pred_check_branch
          %690 = sbr.rel (%p688) target = $region48
        $region47: #{tpu_custom_call.1} parent=27 // pred_region
          _
        $region48: #{tpu_custom_call.1} parent=27 // pred_fallthru
          _
        // Predicated region
        $region49: #{tpu_custom_call.1} parent=27 // pred_check
          %p691 = pneg %p155
        $region50: #{tpu_custom_call.1} parent=27 // pred_check_branch
          %693 = sbr.rel (%p691) target = $region52
        $region51: #{tpu_custom_call.1} parent=27 // pred_region
          _
        $region52: #{tpu_custom_call.1} parent=27 // pred_fallthru
          _
      $region28: #{tpu_custom_call.1} parent=5 // pred_fallthru
        _
      %p694 = scmp.le.s32.totalorder 2, %s14
      // Predicated region
      $region53: #{tpu_custom_call.1} parent=5 // pred_check
        %p695 = pneg %p694
      $region54: #{tpu_custom_call.1} parent=5 // pred_check_branch
        %697 = sbr.rel (%p695) target = $region56
      $region55: #{tpu_custom_call.1} parent=5 // pred_region
        %s698 = ssub.s32 %s14, 2
        // Predicated region
        $region57: #{tpu_custom_call.1} parent=55 // pred_check
          %p699 = pneg %p109
        $region58: #{tpu_custom_call.1} parent=55 // pred_check_branch
          %701 = sbr.rel (%p699) target = $region60
        $region59: #{tpu_custom_call.1} parent=55 // pred_region
          %s702 = smul.u32 16, %s25
          %p703 = scmp.lt.s32.totalorder %s702, 63
          %s704 = scalar_select %p703, %s702, 63
          %s705 = smul.addr %s704, 4
          %s706 = scalar_lea.vmem %s2, %s705
        $region60: #{tpu_custom_call.1} parent=55 // pred_fallthru
          _
        // Predicated region
        $region61: #{tpu_custom_call.1} parent=55 // pred_check
          %p707 = pneg %p135
        $region62: #{tpu_custom_call.1} parent=55 // pred_check_branch
          %709 = sbr.rel (%p707) target = $region64
        $region63: #{tpu_custom_call.1} parent=55 // pred_region
          %p710 = scmp.lt.s32.totalorder %s25, 3
          %s711 = scalar_select %p710, %s25, 3
          %s712 = smul.addr %s711, 8
          %s713 = scalar_lea.vmem %s3, %s712
        $region64: #{tpu_custom_call.1} parent=55 // pred_fallthru
          _
        // Predicated region
        $region65: #{tpu_custom_call.1} parent=55 // pred_check
          %p714 = pneg %p161
        $region66: #{tpu_custom_call.1} parent=55 // pred_check_branch
          %716 = sbr.rel (%p714) target = $region68
        $region67: #{tpu_custom_call.1} parent=55 // pred_region
          %p717 = scmp.lt.s32.totalorder %s25, 3
          %s718 = scalar_select %p717, %s25, 3
          %s719 = smul.addr %s718, 8
          %s720 = scalar_lea.vmem %s4, %s719
        $region68: #{tpu_custom_call.1} parent=55 // pred_fallthru
          _
      $region56: #{tpu_custom_call.1} parent=5 // pred_fallthru
        _
    $region6: #{tpu_custom_call.1} parent=1 // loop_footer
      %s18 = sadd.s32 1, %s14
    $region7: #{tpu_custom_call.1} parent=1 // loop_footer_branch
      %13 = sbr.rel target = $region3
    $region8: #{tpu_custom_call.1} parent=1 // loop_exit
      _
    %721 = vsyncpa [#allocation4], 1
    %s722 = scalar_lea.sflag [#allocation4], 1
    %723 = vsyncpa %s722, 1

</llo_original>
